<compile_context>
chip_gen: v5e
topology: v5e:2x2
jax: 0.10.0
libtpu: 0.0.40
codegen_flags: <defaults>
</compile_context>

<pallas_src>
import numpy as np

import jax
import jax.numpy as jnp
from jax.experimental import pallas as pl
from jax.experimental.pallas import tpu as pltpu


# ---------------------------------------------------------------------------
# Host-side constant preparation (pure layout plumbing, done once per config).
# ---------------------------------------------------------------------------
def _to_phase_lanes(x_nchw):
    """NCHW -> (4*C, N*(H//2)*(W//2)).
    Rows ordered (h-parity, w-parity, channel); lanes ordered (n, r, c) of the
    half-resolution plane (h = 2r + h-parity, w = 2c + w-parity)."""
    n, c, h, w = x_nchw.shape
    xr = x_nchw.reshape(n, c, h // 2, 2, w // 2, 2)     # (n, ci, r, hp, cc, wp)
    xr = jnp.transpose(xr, (3, 5, 1, 0, 2, 4))          # (hp, wp, ci, n, r, cc)
    return xr.reshape(4 * c, n * (h // 2) * (w // 2))


def _prep_conv_w(w_oikk, ntap):
    """Conv2d weight (Co, Ci, 2A, 2A) -> (A*A, Co, 4*Ci).
    Tap (a, b) block maps the phase-layout rows (hpar, wpar, ci) of the
    (full-resolution) input to the Co output channels."""
    co, ci, _, _ = w_oikk.shape
    w = w_oikk.reshape(co, ci, ntap, 2, ntap, 2)        # (co, ci, a, hp, b, wp)
    w = jnp.transpose(w, (2, 4, 0, 3, 5, 1))            # (a, b, co, hp, wp, ci)
    return w.reshape(ntap * ntap, co, 4 * ci)


def _prep_convT_w(w_iokk, ntap):
    """ConvTranspose2d weight (Ci, Co, 2A, 2A) -> (A*A, 4*Co, Ci).
    Tap (e, f) block maps the Ci input channels (low-res) to the phase-layout
    rows (hpar, wpar, co) of the full-resolution output."""
    ci, co, _, _ = w_iokk.shape
    w = w_iokk.reshape(ci, co, ntap, 2, ntap, 2)        # (ci, co, g, ph, h, pw)
    w = w[:, :, ::-1, :, ::-1, :]                       # g -> A-1-e
    w = jnp.transpose(w, (2, 4, 3, 5, 1, 0))            # (e, f, ph, pw, co, ci)
    return w.reshape(ntap * ntap, 4 * co, ci)


def _stack_conv_w(w_oikk, bias, ntap):
    """(Co, T*4Ci + 1): taps stacked along K (tap-major, phase rows minor),
    bias folded as the last column (multiplies the K-stack's ones row)."""
    t = ntap * ntap
    co, ci = w_oikk.shape[0], w_oikk.shape[1]
    w = _prep_conv_w(w_oikk, ntap)                      # (T, Co, 4Ci)
    w = jnp.transpose(w, (1, 0, 2)).reshape(co, t * 4 * ci)
    return jnp.concatenate([w, bias.reshape(co, 1)], axis=1)


def _stack_convT_w(w_iokk, bias, ntap):
    """(4Co, T*Ci + 1): taps stacked along K, bias (tiled over parity) folded."""
    t = ntap * ntap
    ci, co = w_iokk.shape[0], w_iokk.shape[1]
    w = _prep_convT_w(w_iokk, ntap)                     # (T, 4Co, Ci)
    w = jnp.transpose(w, (1, 0, 2)).reshape(4 * co, t * ci)
    b4 = jnp.tile(bias, 4).reshape(4 * co, 1)
    return jnp.concatenate([w, b4], axis=1)


def _tap_offsets(ntap, off):
    return [(a - off, b - off) for a in range(ntap) for b in range(ntap)]


def _build_tap_masks(ntap, off, hq, wq, nb):
    """(T, 1, nb*hq*wq) 0/1 lane masks.  mask[t] zeroes destination positions
    whose tap-(a,b) source falls outside the half-res plane (this replaces the
    old (T,P,P) shift matrices; the shift itself is a pltpu.roll)."""
    P = hq * wq
    masks = np.zeros((ntap * ntap, 1, nb * P), np.float32)
    for t, (da, db) in enumerate(_tap_offsets(ntap, off)):
        r_ok = ((np.arange(hq) + da >= 0) & (np.arange(hq) + da < hq))
        c_ok = ((np.arange(wq) + db >= 0) & (np.arange(wq) + db < wq))
        m = (r_ok[:, None] & c_ok[None, :]).astype(np.float32).reshape(-1)
        masks[t, 0, :] = np.tile(m, nb)
    return jnp.asarray(masks)


def _vmem_limit_bytes():
    # Generation-aware VMEM budget: ~half of physical VMEM (v7x 64 MiB -> 32,
    # v5e/v6e 128 MiB -> 64), with a guarded fallback.  The kernel's actual
    # footprint is < 1 MiB at the tested size.
    try:
        phys = pltpu.get_tpu_info().vmem_capacity_bytes
    except Exception:
        phys = 64 * 1024 * 1024
    return int(min(max(phys // 2, 16 * 1024 * 1024), 100 * 1024 * 1024))


# ---------------------------------------------------------------------------
# Fused DeepDownBlock forward (single pallas_call).
# ---------------------------------------------------------------------------
def deep_down_block(x_nchw, params, kernel_size, stride, padding):
    n, c_in, h, w = x_nchw.shape
    c = params["w_deep"].shape[0]
    assert stride == 2 and padding % 2 == 0 and kernel_size == 2 * padding + 2, (
        "fused kernel is specialised to the DBPN down-block config "
        "(stride 2, kernel_size == 2*padding + 2)")
    assert h % 2 == 0 and w % 2 == 0

    ntap = kernel_size // 2           # taps per axis after phase decomposition
    off = padding // 2
    nshift = ntap * ntap
    hq, wq = h // 2, w // 2
    P = hq * wq
    c_in4, c4 = 4 * c_in, 4 * c

    # Images per grid step: fold `nb` images into the lane axis so the lane
    # width is a multiple of 128 (lane-dense stores, wide matmul N-dim).
    nb = None
    for d in range(n, 0, -1):
        if n % d == 0 and d * P <= 4096 and (d * P) % 128 == 0:
            nb = d
            break
    if nb is None:
        nb = 1 if (P % 128 == 0 or n == 1) else n
    lane_blk = nb * P
    n_blocks = n // nb
    total_lanes = n * P

    # ---- host-side constant / layout prep -----------------------------------
    x_ph = _to_phase_lanes(x_nchw.astype(jnp.float32))               # (4Cin, N*P)
    x_aug = jnp.concatenate(
        [x_ph, jnp.ones((1, total_lanes), jnp.float32)], axis=0)     # + ones row

    # 1x1 conv as a block-diagonal matmul over the 4 parity planes, bias folded.
    # (At production channel counts, replace the 75%-zero kron with 4 per-parity
    #  (C, Cin) matmuls; at C=4 the waste is noise.)
    w0 = jnp.kron(jnp.eye(4, dtype=jnp.float32),
                  params["w_deep"][:, :, 0, 0].astype(jnp.float32))  # (4C, 4Cin)
    b0 = jnp.tile(params["b_deep"], 4).reshape(c4, 1)
    w0a = jnp.concatenate([w0, b0], axis=1)                          # (4C, 4Cin+1)

    w1a = _stack_conv_w(params["w1"], params["b1"], ntap)            # (C,  T*4C+1)
    w2a = _stack_convT_w(params["w2"], params["b2"], ntap)           # (4C, T*C +1)
    w3a = _stack_conv_w(params["w3"], params["b3"], ntap)            # (C,  T*4C+1)
    masks = _build_tap_masks(ntap, off, hq, wq, nb)                  # (T, 1, L)
    alphas = jnp.stack([params["a_deep"], params["a1"],
                        params["a2"], params["a3"]]).astype(jnp.float32)

    # Per-tap roll amount (jnp.roll convention: out[l] = in[l - shift]) and
    # whether the tap is the unshifted / unmasked centre tap.
    tap_meta = []
    for (da, db) in _tap_offsets(ntap, off):
        k = da * wq + db
        tap_meta.append((int((-k) % lane_blk), da == 0 and db == 0))

    k_big = nshift * c4               # stacked K for conv1 / conv3
    k_small = nshift * c              # stacked K for the transposed conv

    def kernel(alpha_ref, x_ref, w0_ref, w1_ref, w2_ref, w3_ref, m_ref,
               o_ref, stk_b, stk_s):
        a0 = alpha_ref[0]             # PReLU slopes from SMEM (scalars)
        a1 = alpha_ref[1]
        a2 = alpha_ref[2]
        a3 = alpha_ref[3]

        # Trailing ones-rows of the K-stacks: they multiply the bias columns
        # folded into the stacked weights.
        ones_row = jnp.ones((1, lane_blk), jnp.float32)
        stk_b[k_big:k_big + 1, :] = ones_row
        stk_s[k_small:k_small + 1, :] = ones_row

        # Edge masks, loaded once and reused by all three tap-conv stages.
        mask_vals = [None if center else m_ref[t]
                     for t, (_, center) in enumerate(tap_meta)]

        def build_stack(act, stk_ref, rows):
            # Shifted copies of `act` stacked along K: tap t occupies rows
            # [t*rows, (t+1)*rows).  Shift = XLU lane roll, edge fill = mask.
            for t, (shift, center) in enumerate(tap_meta):
                if center:
                    piece = act
                else:
                    piece = pltpu.roll(act, shift, axis=1) * mask_vals[t]
                stk_ref[t * rows:(t + 1) * rows, :] = piece

        x_b = x_ref[...]                                              # (4Cin+1, L)

        # deep_conv: 1x1 conv (block-diag over parity, bias folded) + PReLU
        z0 = jnp.dot(w0_ref[...], x_b, preferred_element_type=jnp.float32)
        deep = jnp.where(z0 >= 0.0, z0, a0 * z0)                      # (4C, L)

        # conv1: 6x6 stride-2 conv + PReLU  -> one K = 9*4C+1 contraction
        build_stack(deep, stk_b, c4)
        z1 = jnp.dot(w1_ref[...], stk_b[...], preferred_element_type=jnp.float32)
        c1 = jnp.where(z1 >= 0.0, z1, a1 * z1)                        # (C, L)

        # conv2: 6x6 stride-2 ConvTranspose + PReLU, minus deep (fused skip)
        build_stack(c1, stk_s, c)
        z2 = jnp.dot(w2_ref[...], stk_s[...], preferred_element_type=jnp.float32)
        c2 = jnp.where(z2 >= 0.0, z2, a2 * z2) - deep                 # (4C, L)

        # conv3: 6x6 stride-2 conv + PReLU, plus conv1 (fused skip)
        build_stack(c2, stk_b, c4)
        z3 = jnp.dot(w3_ref[...], stk_b[...], preferred_element_type=jnp.float32)
        o_ref[...] = jnp.where(z3 >= 0.0, z3, a3 * z3) + c1           # (C, L)

    out_flat = pl.pallas_call(
        kernel,
        out_shape=jax.ShapeDtypeStruct((c, total_lanes), jnp.float32),
        grid=(n_blocks,),
        in_specs=[
            pl.BlockSpec(memory_space=pltpu.MemorySpace.SMEM),          # PReLU slopes
            pl.BlockSpec((c_in4 + 1, lane_blk), lambda i: (0, i)),      # x (+ ones row)
            pl.BlockSpec((c4, c_in4 + 1), lambda i: (0, 0)),            # w_deep (+bias)
            pl.BlockSpec((c, k_big + 1), lambda i: (0, 0)),             # w1 stacked (+bias)
            pl.BlockSpec((c4, k_small + 1), lambda i: (0, 0)),          # w2 stacked (+bias)
            pl.BlockSpec((c, k_big + 1), lambda i: (0, 0)),             # w3 stacked (+bias)
            pl.BlockSpec((nshift, 1, lane_blk), lambda i: (0, 0, 0)),   # tap edge masks
        ],
        out_specs=pl.BlockSpec((c, lane_blk), lambda i: (0, i)),
        scratch_shapes=[
            pltpu.VMEM((k_big + 1, lane_blk), jnp.float32),    # conv1/conv3 K-stack
            pltpu.VMEM((k_small + 1, lane_blk), jnp.float32),  # convT K-stack
        ],
        compiler_params=pltpu.CompilerParams(
            dimension_semantics=("parallel",),   # batch-blocks shard across TCs
            vmem_limit_bytes=_vmem_limit_bytes(),
        ),
    )(alphas, x_aug, w0a, w1a, w2a, w3a, masks)

    # (C, N*P) -> (N, C, H/2, W/2)
    return jnp.transpose(out_flat.reshape(c, n, hq, wq), (1, 0, 2, 3))


# ---------------------------------------------------------------------------
# Pure-JAX reference (XLA convs) for the correctness check.
# ---------------------------------------------------------------------------
def _prelu(x, a):
    return jnp.where(x >= 0.0, x, a * x)


def _conv_ref(x, w, b, stride, pad):
    y = jax.lax.conv_general_dilated(
        x, w, (stride, stride), [(pad, pad), (pad, pad)],
        dimension_numbers=("NCHW", "OIHW", "NCHW"))
    return y + b[None, :, None, None]


def _convT_ref(x, w_ioHW, b, stride, pad):
    k = w_ioHW.shape[2]
    w_eff = jnp.transpose(w_ioHW[:, :, ::-1, ::-1], (1, 0, 2, 3))
    y = jax.lax.conv_general_dilated(
        x, w_eff, (1, 1), [(k - 1 - pad, k - 1 - pad)] * 2,
        lhs_dilation=(stride, stride),
        dimension_numbers=("NCHW", "OIHW", "NCHW"))
    return y + b[None, :, None, None]


def deep_down_block_ref(x, params, k, s, p):
    deep = _prelu(_conv_ref(x, params["w_deep"], params["b_deep"], 1, 0),
                  params["a_deep"])
    c1 = _prelu(_conv_ref(deep, params["w1"], params["b1"], s, p), params["a1"])
    c2 = _prelu(_convT_ref(c1, params["w2"], params["b2"], s, p), params["a2"]) - deep
    c3 = _prelu(_conv_ref(c2, params["w3"], params["b3"], s, p), params["a3"])
    return c3 + c1


# ---------------------------------------------------------------------------
if __name__ == "__main__":
    # Standard DBPN down-block config: kernel=6, stride=2, padding=2.
    channels, num_stage = 4, 2
    kernel_size, stride, padding = 6, 2, 2
    N, H, W = 2, 16, 16

    key = jax.random.PRNGKey(0)
    ks = jax.random.split(key, 9)
    C = channels
    params = {
        "w_deep": 0.1 * jax.random.normal(ks[0], (C, C * num_stage, 1, 1), jnp.float32),
        "b_deep": 0.1 * jax.random.normal(ks[1], (C,), jnp.float32),
        "a_deep": jnp.float32(0.25),                     # PReLU default init
        "w1": 0.1 * jax.random.normal(ks[2], (C, C, kernel_size, kernel_size), jnp.float32),
        "b1": 0.1 * jax.random.normal(ks[3], (C,), jnp.float32),
        "a1": jnp.float32(0.25),
        "w2": 0.1 * jax.random.normal(ks[4], (C, C, kernel_size, kernel_size), jnp.float32),  # ConvT: (Cin,Cout,k,k)
        "b2": 0.1 * jax.random.normal(ks[5], (C,), jnp.float32),
        "a2": jnp.float32(0.25),
        "w3": 0.1 * jax.random.normal(ks[6], (C, C, kernel_size, kernel_size), jnp.float32),
        "b3": 0.1 * jax.random.normal(ks[7], (C,), jnp.float32),
        "a3": jnp.float32(0.25),
    }

    x = jax.random.normal(ks[8], (N, C * num_stage, H, W), jnp.float32)

    out = deep_down_block(x, params, kernel_size, stride, padding)
    out = jax.block_until_ready(out)

    ref = jax.block_until_ready(
        deep_down_block_ref(x, params, kernel_size, stride, padding))
    assert out.shape == ref.shape == (N, C, H // stride, W // stride)
    assert jnp.allclose(out, ref, rtol=1e-4, atol=1e-4), \
        float(jnp.max(jnp.abs(out - ref)))

    print("KERNEL_OK")
</pallas_src>

<mosaic_0001>
module attributes {stable_mosaic.version = 11 : i64} {
  func.func @kernel(%arg0: i32, %arg1: memref<4xf32, #tpu.memory_space<smem>>, %arg2: memref<33x128xf32, #tpu.memory_space<vmem>>, %arg3: memref<16x33xf32, #tpu.memory_space<vmem>>, %arg4: memref<4x145xf32, #tpu.memory_space<vmem>>, %arg5: memref<16x37xf32, #tpu.memory_space<vmem>>, %arg6: memref<4x145xf32, #tpu.memory_space<vmem>>, %arg7: memref<9x1x128xf32, #tpu.memory_space<vmem>>, %arg8: memref<4x128xf32, #tpu.memory_space<vmem>>, %arg9: memref<145x128xf32, #tpu.memory_space<vmem>>, %arg10: memref<37x128xf32, #tpu.memory_space<vmem>>) attributes {dimension_semantics = [#tpu.dimension_semantics<parallel>], iteration_bounds = array<i64: 1>, scalar_prefetch = 0 : i64, scratch_operands = 2 : i64, tpu.core_type = #tpu.core_type<tc>, window_params = [{transform_indices = @transform_0, window_bounds = array<i64: 4>}, {transform_indices = @transform_1, window_bounds = array<i64: 33, 128>}, {pipeline_mode = #tpu.pipeline_mode<synchronous>, transform_indices = @transform_2, window_bounds = array<i64: 16, 33>}, {pipeline_mode = #tpu.pipeline_mode<synchronous>, transform_indices = @transform_3, window_bounds = array<i64: 4, 145>}, {pipeline_mode = #tpu.pipeline_mode<synchronous>, transform_indices = @transform_4, window_bounds = array<i64: 16, 37>}, {pipeline_mode = #tpu.pipeline_mode<synchronous>, transform_indices = @transform_5, window_bounds = array<i64: 4, 145>}, {pipeline_mode = #tpu.pipeline_mode<synchronous>, transform_indices = @transform_6, window_bounds = array<i64: 9, 1, 128>}, {transform_indices = @transform_7, window_bounds = array<i64: 4, 128>}]} {
    %c0 = arith.constant 0 : index
    %0 = memref.load %arg1[%c0] : memref<4xf32, #tpu.memory_space<smem>>
    %c1 = arith.constant 1 : index
    %1 = memref.load %arg1[%c1] : memref<4xf32, #tpu.memory_space<smem>>
    %c2 = arith.constant 2 : index
    %2 = memref.load %arg1[%c2] : memref<4xf32, #tpu.memory_space<smem>>
    %c3 = arith.constant 3 : index
    %3 = memref.load %arg1[%c3] : memref<4xf32, #tpu.memory_space<smem>>
    %cst = arith.constant 1.000000e+00 : f32
    %4 = vector.broadcast %cst : f32 to vector<1x128xf32>
    %c144 = arith.constant 144 : index
    %c0_0 = arith.constant 0 : index
    %5 = vector.load %arg9[%c144, %c0_0] : memref<145x128xf32, #tpu.memory_space<vmem>>, vector<1x128xf32>
    tpu.vector_store %arg9[%c144, %c0_0], %4 {strides = array<i32>} : memref<145x128xf32, #tpu.memory_space<vmem>>, vector<1x128xf32>,
    %c36 = arith.constant 36 : index
    %c0_1 = arith.constant 0 : index
    %6 = vector.load %arg10[%c36, %c0_1] : memref<37x128xf32, #tpu.memory_space<vmem>>, vector<1x128xf32>
    tpu.vector_store %arg10[%c36, %c0_1], %4 {strides = array<i32>} : memref<37x128xf32, #tpu.memory_space<vmem>>, vector<1x128xf32>,
    %c0_2 = arith.constant 0 : index
    %c0_3 = arith.constant 0 : index
    %c0_4 = arith.constant 0 : index
    %7 = vector.load %arg7[%c0_2, %c0_3, %c0_4] : memref<9x1x128xf32, #tpu.memory_space<vmem>>, vector<1x1x128xf32>
    %8 = vector.shape_cast %7 : vector<1x1x128xf32> to vector<1x128xf32>
    %c1_5 = arith.constant 1 : index
    %c0_6 = arith.constant 0 : index
    %c0_7 = arith.constant 0 : index
    %9 = vector.load %arg7[%c1_5, %c0_6, %c0_7] : memref<9x1x128xf32, #tpu.memory_space<vmem>>, vector<1x1x128xf32>
    %10 = vector.shape_cast %9 : vector<1x1x128xf32> to vector<1x128xf32>
    %c2_8 = arith.constant 2 : index
    %c0_9 = arith.constant 0 : index
    %c0_10 = arith.constant 0 : index
    %11 = vector.load %arg7[%c2_8, %c0_9, %c0_10] : memref<9x1x128xf32, #tpu.memory_space<vmem>>, vector<1x1x128xf32>
    %12 = vector.shape_cast %11 : vector<1x1x128xf32> to vector<1x128xf32>
    %c3_11 = arith.constant 3 : index
    %c0_12 = arith.constant 0 : index
    %c0_13 = arith.constant 0 : index
    %13 = vector.load %arg7[%c3_11, %c0_12, %c0_13] : memref<9x1x128xf32, #tpu.memory_space<vmem>>, vector<1x1x128xf32>
    %14 = vector.shape_cast %13 : vector<1x1x128xf32> to vector<1x128xf32>
    %c5 = arith.constant 5 : index
    %c0_14 = arith.constant 0 : index
    %c0_15 = arith.constant 0 : index
    %15 = vector.load %arg7[%c5, %c0_14, %c0_15] : memref<9x1x128xf32, #tpu.memory_space<vmem>>, vector<1x1x128xf32>
    %16 = vector.shape_cast %15 : vector<1x1x128xf32> to vector<1x128xf32>
    %c6 = arith.constant 6 : index
    %c0_16 = arith.constant 0 : index
    %c0_17 = arith.constant 0 : index
    %17 = vector.load %arg7[%c6, %c0_16, %c0_17] : memref<9x1x128xf32, #tpu.memory_space<vmem>>, vector<1x1x128xf32>
    %18 = vector.shape_cast %17 : vector<1x1x128xf32> to vector<1x128xf32>
    %c7 = arith.constant 7 : index
    %c0_18 = arith.constant 0 : index
    %c0_19 = arith.constant 0 : index
    %19 = vector.load %arg7[%c7, %c0_18, %c0_19] : memref<9x1x128xf32, #tpu.memory_space<vmem>>, vector<1x1x128xf32>
    %20 = vector.shape_cast %19 : vector<1x1x128xf32> to vector<1x128xf32>
    %c8 = arith.constant 8 : index
    %c0_20 = arith.constant 0 : index
    %c0_21 = arith.constant 0 : index
    %21 = vector.load %arg7[%c8, %c0_20, %c0_21] : memref<9x1x128xf32, #tpu.memory_space<vmem>>, vector<1x1x128xf32>
    %22 = vector.shape_cast %21 : vector<1x1x128xf32> to vector<1x128xf32>
    %c0_22 = arith.constant 0 : index
    %c0_23 = arith.constant 0 : index
    %23 = vector.load %arg2[%c0_22, %c0_23] : memref<33x128xf32, #tpu.memory_space<vmem>>, vector<33x128xf32>
    %c0_24 = arith.constant 0 : index
    %c0_25 = arith.constant 0 : index
    %24 = vector.load %arg3[%c0_24, %c0_25] : memref<16x33xf32, #tpu.memory_space<vmem>>, vector<16x33xf32>
    %cst_26 = arith.constant dense<0.000000e+00> : vector<16x128xf32>
    %25 = tpu.matmul %24, %23, %cst_26 {dimension_numbers = #tpu.dot_dimension_numbers<[1], [0], [0], [1], [0, 0, 1, 1], [], []>} : vector<16x33xf32>, vector<33x128xf32>, vector<16x128xf32> -> vector<16x128xf32>
    %cst_27 = arith.constant 0.000000e+00 : f32
    %26 = vector.broadcast %cst_27 : f32 to vector<16x128xf32>
    %27 = arith.cmpf oge, %25, %26 : vector<16x128xf32>
    %28 = vector.broadcast %0 : f32 to vector<16x128xf32>
    %29 = arith.mulf %28, %25 : vector<16x128xf32>
    %30 = arith.select %27, %25, %29 : vector<16x128xi1>, vector<16x128xf32>
    %c9_i32 = arith.constant 9 : i32
    %31 = tpu.dynamic_rotate %30 by %c9_i32 dim 1 : vector<16x128xf32>, i32 -> vector<16x128xf32>
    %32 = vector.broadcast %8 : vector<1x128xf32> to vector<16x128xf32>
    %33 = arith.mulf %31, %32 : vector<16x128xf32>
    %c0_28 = arith.constant 0 : index
    %c0_29 = arith.constant 0 : index
    %34 = vector.load %arg9[%c0_28, %c0_29] : memref<145x128xf32, #tpu.memory_space<vmem>>, vector<16x128xf32>
    tpu.vector_store %arg9[%c0_28, %c0_29], %33 {strides = array<i32>} : memref<145x128xf32, #tpu.memory_space<vmem>>, vector<16x128xf32>,
    %c8_i32 = arith.constant 8 : i32
    %35 = tpu.dynamic_rotate %30 by %c8_i32 dim 1 : vector<16x128xf32>, i32 -> vector<16x128xf32>
    %36 = vector.broadcast %10 : vector<1x128xf32> to vector<16x128xf32>
    %37 = arith.mulf %35, %36 : vector<16x128xf32>
    %c16 = arith.constant 16 : index
    %c0_30 = arith.constant 0 : index
    %38 = vector.load %arg9[%c16, %c0_30] : memref<145x128xf32, #tpu.memory_space<vmem>>, vector<16x128xf32>
    tpu.vector_store %arg9[%c16, %c0_30], %37 {strides = array<i32>} : memref<145x128xf32, #tpu.memory_space<vmem>>, vector<16x128xf32>,
    %c7_i32 = arith.constant 7 : i32
    %39 = tpu.dynamic_rotate %30 by %c7_i32 dim 1 : vector<16x128xf32>, i32 -> vector<16x128xf32>
    %40 = vector.broadcast %12 : vector<1x128xf32> to vector<16x128xf32>
    %41 = arith.mulf %39, %40 : vector<16x128xf32>
    %c32 = arith.constant 32 : index
    %c0_31 = arith.constant 0 : index
    %42 = vector.load %arg9[%c32, %c0_31] : memref<145x128xf32, #tpu.memory_space<vmem>>, vector<16x128xf32>
    tpu.vector_store %arg9[%c32, %c0_31], %41 {strides = array<i32>} : memref<145x128xf32, #tpu.memory_space<vmem>>, vector<16x128xf32>,
    %c1_i32 = arith.constant 1 : i32
    %43 = tpu.dynamic_rotate %30 by %c1_i32 dim 1 : vector<16x128xf32>, i32 -> vector<16x128xf32>
    %44 = vector.broadcast %14 : vector<1x128xf32> to vector<16x128xf32>
    %45 = arith.mulf %43, %44 : vector<16x128xf32>
    %c48 = arith.constant 48 : index
    %c0_32 = arith.constant 0 : index
    %46 = vector.load %arg9[%c48, %c0_32] : memref<145x128xf32, #tpu.memory_space<vmem>>, vector<16x128xf32>
    tpu.vector_store %arg9[%c48, %c0_32], %45 {strides = array<i32>} : memref<145x128xf32, #tpu.memory_space<vmem>>, vector<16x128xf32>,
    %c64 = arith.constant 64 : index
    %c0_33 = arith.constant 0 : index
    %47 = vector.load %arg9[%c64, %c0_33] : memref<145x128xf32, #tpu.memory_space<vmem>>, vector<16x128xf32>
    tpu.vector_store %arg9[%c64, %c0_33], %30 {strides = array<i32>} : memref<145x128xf32, #tpu.memory_space<vmem>>, vector<16x128xf32>,
    %c127_i32 = arith.constant 127 : i32
    %48 = tpu.dynamic_rotate %30 by %c127_i32 dim 1 : vector<16x128xf32>, i32 -> vector<16x128xf32>
    %49 = vector.broadcast %16 : vector<1x128xf32> to vector<16x128xf32>
    %50 = arith.mulf %48, %49 : vector<16x128xf32>
    %c80 = arith.constant 80 : index
    %c0_34 = arith.constant 0 : index
    %51 = vector.load %arg9[%c80, %c0_34] : memref<145x128xf32, #tpu.memory_space<vmem>>, vector<16x128xf32>
    tpu.vector_store %arg9[%c80, %c0_34], %50 {strides = array<i32>} : memref<145x128xf32, #tpu.memory_space<vmem>>, vector<16x128xf32>,
    %c121_i32 = arith.constant 121 : i32
    %52 = tpu.dynamic_rotate %30 by %c121_i32 dim 1 : vector<16x128xf32>, i32 -> vector<16x128xf32>
    %53 = vector.broadcast %18 : vector<1x128xf32> to vector<16x128xf32>
    %54 = arith.mulf %52, %53 : vector<16x128xf32>
    %c96 = arith.constant 96 : index
    %c0_35 = arith.constant 0 : index
    %55 = vector.load %arg9[%c96, %c0_35] : memref<145x128xf32, #tpu.memory_space<vmem>>, vector<16x128xf32>
    tpu.vector_store %arg9[%c96, %c0_35], %54 {strides = array<i32>} : memref<145x128xf32, #tpu.memory_space<vmem>>, vector<16x128xf32>,
    %c120_i32 = arith.constant 120 : i32
    %56 = tpu.dynamic_rotate %30 by %c120_i32 dim 1 : vector<16x128xf32>, i32 -> vector<16x128xf32>
    %57 = vector.broadcast %20 : vector<1x128xf32> to vector<16x128xf32>
    %58 = arith.mulf %56, %57 : vector<16x128xf32>
    %c112 = arith.constant 112 : index
    %c0_36 = arith.constant 0 : index
    %59 = vector.load %arg9[%c112, %c0_36] : memref<145x128xf32, #tpu.memory_space<vmem>>, vector<16x128xf32>
    tpu.vector_store %arg9[%c112, %c0_36], %58 {strides = array<i32>} : memref<145x128xf32, #tpu.memory_space<vmem>>, vector<16x128xf32>,
    %c119_i32 = arith.constant 119 : i32
    %60 = tpu.dynamic_rotate %30 by %c119_i32 dim 1 : vector<16x128xf32>, i32 -> vector<16x128xf32>
    %61 = vector.broadcast %22 : vector<1x128xf32> to vector<16x128xf32>
    %62 = arith.mulf %60, %61 : vector<16x128xf32>
    %c128 = arith.constant 128 : index
    %c0_37 = arith.constant 0 : index
    %63 = vector.load %arg9[%c128, %c0_37] : memref<145x128xf32, #tpu.memory_space<vmem>>, vector<16x128xf32>
    tpu.vector_store %arg9[%c128, %c0_37], %62 {strides = array<i32>} : memref<145x128xf32, #tpu.memory_space<vmem>>, vector<16x128xf32>,
    %c0_38 = arith.constant 0 : index
    %c0_39 = arith.constant 0 : index
    %64 = vector.load %arg4[%c0_38, %c0_39] : memref<4x145xf32, #tpu.memory_space<vmem>>, vector<4x145xf32>
    %c0_40 = arith.constant 0 : index
    %c0_41 = arith.constant 0 : index
    %65 = vector.load %arg9[%c0_40, %c0_41] : memref<145x128xf32, #tpu.memory_space<vmem>>, vector<145x128xf32>
    %cst_42 = arith.constant dense<0.000000e+00> : vector<4x128xf32>
    %66 = tpu.matmul %64, %65, %cst_42 {dimension_numbers = #tpu.dot_dimension_numbers<[1], [0], [0], [1], [0, 0, 1, 1], [], []>} : vector<4x145xf32>, vector<145x128xf32>, vector<4x128xf32> -> vector<4x128xf32>
    %cst_43 = arith.constant 0.000000e+00 : f32
    %67 = vector.broadcast %cst_43 : f32 to vector<4x128xf32>
    %68 = arith.cmpf oge, %66, %67 : vector<4x128xf32>
    %69 = vector.broadcast %1 : f32 to vector<4x128xf32>
    %70 = arith.mulf %69, %66 : vector<4x128xf32>
    %71 = arith.select %68, %66, %70 : vector<4x128xi1>, vector<4x128xf32>
    %c9_i32_44 = arith.constant 9 : i32
    %72 = tpu.dynamic_rotate %71 by %c9_i32_44 dim 1 : vector<4x128xf32>, i32 -> vector<4x128xf32>
    %73 = vector.broadcast %8 : vector<1x128xf32> to vector<4x128xf32>
    %74 = arith.mulf %72, %73 : vector<4x128xf32>
    %c0_45 = arith.constant 0 : index
    %c0_46 = arith.constant 0 : index
    %75 = vector.load %arg10[%c0_45, %c0_46] : memref<37x128xf32, #tpu.memory_space<vmem>>, vector<4x128xf32>
    tpu.vector_store %arg10[%c0_45, %c0_46], %74 {strides = array<i32>} : memref<37x128xf32, #tpu.memory_space<vmem>>, vector<4x128xf32>,
    %c8_i32_47 = arith.constant 8 : i32
    %76 = tpu.dynamic_rotate %71 by %c8_i32_47 dim 1 : vector<4x128xf32>, i32 -> vector<4x128xf32>
    %77 = vector.broadcast %10 : vector<1x128xf32> to vector<4x128xf32>
    %78 = arith.mulf %76, %77 : vector<4x128xf32>
    %c4 = arith.constant 4 : index
    %c0_48 = arith.constant 0 : index
    %79 = vector.load %arg10[%c4, %c0_48] : memref<37x128xf32, #tpu.memory_space<vmem>>, vector<4x128xf32>
    tpu.vector_store %arg10[%c4, %c0_48], %78 {strides = array<i32>} : memref<37x128xf32, #tpu.memory_space<vmem>>, vector<4x128xf32>,
    %c7_i32_49 = arith.constant 7 : i32
    %80 = tpu.dynamic_rotate %71 by %c7_i32_49 dim 1 : vector<4x128xf32>, i32 -> vector<4x128xf32>
    %81 = vector.broadcast %12 : vector<1x128xf32> to vector<4x128xf32>
    %82 = arith.mulf %80, %81 : vector<4x128xf32>
    %c8_50 = arith.constant 8 : index
    %c0_51 = arith.constant 0 : index
    %83 = vector.load %arg10[%c8_50, %c0_51] : memref<37x128xf32, #tpu.memory_space<vmem>>, vector<4x128xf32>
    tpu.vector_store %arg10[%c8_50, %c0_51], %82 {strides = array<i32>} : memref<37x128xf32, #tpu.memory_space<vmem>>, vector<4x128xf32>,
    %c1_i32_52 = arith.constant 1 : i32
    %84 = tpu.dynamic_rotate %71 by %c1_i32_52 dim 1 : vector<4x128xf32>, i32 -> vector<4x128xf32>
    %85 = vector.broadcast %14 : vector<1x128xf32> to vector<4x128xf32>
    %86 = arith.mulf %84, %85 : vector<4x128xf32>
    %c12 = arith.constant 12 : index
    %c0_53 = arith.constant 0 : index
    %87 = vector.load %arg10[%c12, %c0_53] : memref<37x128xf32, #tpu.memory_space<vmem>>, vector<4x128xf32>
    tpu.vector_store %arg10[%c12, %c0_53], %86 {strides = array<i32>} : memref<37x128xf32, #tpu.memory_space<vmem>>, vector<4x128xf32>,
    %c16_54 = arith.constant 16 : index
    %c0_55 = arith.constant 0 : index
    %88 = vector.load %arg10[%c16_54, %c0_55] : memref<37x128xf32, #tpu.memory_space<vmem>>, vector<4x128xf32>
    tpu.vector_store %arg10[%c16_54, %c0_55], %71 {strides = array<i32>} : memref<37x128xf32, #tpu.memory_space<vmem>>, vector<4x128xf32>,
    %c127_i32_56 = arith.constant 127 : i32
    %89 = tpu.dynamic_rotate %71 by %c127_i32_56 dim 1 : vector<4x128xf32>, i32 -> vector<4x128xf32>
    %90 = vector.broadcast %16 : vector<1x128xf32> to vector<4x128xf32>
    %91 = arith.mulf %89, %90 : vector<4x128xf32>
    %c20 = arith.constant 20 : index
    %c0_57 = arith.constant 0 : index
    %92 = vector.load %arg10[%c20, %c0_57] : memref<37x128xf32, #tpu.memory_space<vmem>>, vector<4x128xf32>
    tpu.vector_store %arg10[%c20, %c0_57], %91 {strides = array<i32>} : memref<37x128xf32, #tpu.memory_space<vmem>>, vector<4x128xf32>,
    %c121_i32_58 = arith.constant 121 : i32
    %93 = tpu.dynamic_rotate %71 by %c121_i32_58 dim 1 : vector<4x128xf32>, i32 -> vector<4x128xf32>
    %94 = vector.broadcast %18 : vector<1x128xf32> to vector<4x128xf32>
    %95 = arith.mulf %93, %94 : vector<4x128xf32>
    %c24 = arith.constant 24 : index
    %c0_59 = arith.constant 0 : index
    %96 = vector.load %arg10[%c24, %c0_59] : memref<37x128xf32, #tpu.memory_space<vmem>>, vector<4x128xf32>
    tpu.vector_store %arg10[%c24, %c0_59], %95 {strides = array<i32>} : memref<37x128xf32, #tpu.memory_space<vmem>>, vector<4x128xf32>,
    %c120_i32_60 = arith.constant 120 : i32
    %97 = tpu.dynamic_rotate %71 by %c120_i32_60 dim 1 : vector<4x128xf32>, i32 -> vector<4x128xf32>
    %98 = vector.broadcast %20 : vector<1x128xf32> to vector<4x128xf32>
    %99 = arith.mulf %97, %98 : vector<4x128xf32>
    %c28 = arith.constant 28 : index
    %c0_61 = arith.constant 0 : index
    %100 = vector.load %arg10[%c28, %c0_61] : memref<37x128xf32, #tpu.memory_space<vmem>>, vector<4x128xf32>
    tpu.vector_store %arg10[%c28, %c0_61], %99 {strides = array<i32>} : memref<37x128xf32, #tpu.memory_space<vmem>>, vector<4x128xf32>,
    %c119_i32_62 = arith.constant 119 : i32
    %101 = tpu.dynamic_rotate %71 by %c119_i32_62 dim 1 : vector<4x128xf32>, i32 -> vector<4x128xf32>
    %102 = vector.broadcast %22 : vector<1x128xf32> to vector<4x128xf32>
    %103 = arith.mulf %101, %102 : vector<4x128xf32>
    %c32_63 = arith.constant 32 : index
    %c0_64 = arith.constant 0 : index
    %104 = vector.load %arg10[%c32_63, %c0_64] : memref<37x128xf32, #tpu.memory_space<vmem>>, vector<4x128xf32>
    tpu.vector_store %arg10[%c32_63, %c0_64], %103 {strides = array<i32>} : memref<37x128xf32, #tpu.memory_space<vmem>>, vector<4x128xf32>,
    %c0_65 = arith.constant 0 : index
    %c0_66 = arith.constant 0 : index
    %105 = vector.load %arg5[%c0_65, %c0_66] : memref<16x37xf32, #tpu.memory_space<vmem>>, vector<16x37xf32>
    %c0_67 = arith.constant 0 : index
    %c0_68 = arith.constant 0 : index
    %106 = vector.load %arg10[%c0_67, %c0_68] : memref<37x128xf32, #tpu.memory_space<vmem>>, vector<37x128xf32>
    %cst_69 = arith.constant dense<0.000000e+00> : vector<16x128xf32>
    %107 = tpu.matmul %105, %106, %cst_69 {dimension_numbers = #tpu.dot_dimension_numbers<[1], [0], [0], [1], [0, 0, 1, 1], [], []>} : vector<16x37xf32>, vector<37x128xf32>, vector<16x128xf32> -> vector<16x128xf32>
    %cst_70 = arith.constant 0.000000e+00 : f32
    %108 = vector.broadcast %cst_70 : f32 to vector<16x128xf32>
    %109 = arith.cmpf oge, %107, %108 : vector<16x128xf32>
    %110 = vector.broadcast %2 : f32 to vector<16x128xf32>
    %111 = arith.mulf %110, %107 : vector<16x128xf32>
    %112 = arith.select %109, %107, %111 : vector<16x128xi1>, vector<16x128xf32>
    %113 = arith.subf %112, %30 : vector<16x128xf32>
    %c9_i32_71 = arith.constant 9 : i32
    %114 = tpu.dynamic_rotate %113 by %c9_i32_71 dim 1 : vector<16x128xf32>, i32 -> vector<16x128xf32>
    %115 = vector.broadcast %8 : vector<1x128xf32> to vector<16x128xf32>
    %116 = arith.mulf %114, %115 : vector<16x128xf32>
    %c0_72 = arith.constant 0 : index
    %c0_73 = arith.constant 0 : index
    %117 = vector.load %arg9[%c0_72, %c0_73] : memref<145x128xf32, #tpu.memory_space<vmem>>, vector<16x128xf32>
    tpu.vector_store %arg9[%c0_72, %c0_73], %116 {strides = array<i32>} : memref<145x128xf32, #tpu.memory_space<vmem>>, vector<16x128xf32>,
    %c8_i32_74 = arith.constant 8 : i32
    %118 = tpu.dynamic_rotate %113 by %c8_i32_74 dim 1 : vector<16x128xf32>, i32 -> vector<16x128xf32>
    %119 = vector.broadcast %10 : vector<1x128xf32> to vector<16x128xf32>
    %120 = arith.mulf %118, %119 : vector<16x128xf32>
    %c16_75 = arith.constant 16 : index
    %c0_76 = arith.constant 0 : index
    %121 = vector.load %arg9[%c16_75, %c0_76] : memref<145x128xf32, #tpu.memory_space<vmem>>, vector<16x128xf32>
    tpu.vector_store %arg9[%c16_75, %c0_76], %120 {strides = array<i32>} : memref<145x128xf32, #tpu.memory_space<vmem>>, vector<16x128xf32>,
    %c7_i32_77 = arith.constant 7 : i32
    %122 = tpu.dynamic_rotate %113 by %c7_i32_77 dim 1 : vector<16x128xf32>, i32 -> vector<16x128xf32>
    %123 = vector.broadcast %12 : vector<1x128xf32> to vector<16x128xf32>
    %124 = arith.mulf %122, %123 : vector<16x128xf32>
    %c32_78 = arith.constant 32 : index
    %c0_79 = arith.constant 0 : index
    %125 = vector.load %arg9[%c32_78, %c0_79] : memref<145x128xf32, #tpu.memory_space<vmem>>, vector<16x128xf32>
    tpu.vector_store %arg9[%c32_78, %c0_79], %124 {strides = array<i32>} : memref<145x128xf32, #tpu.memory_space<vmem>>, vector<16x128xf32>,
    %c1_i32_80 = arith.constant 1 : i32
    %126 = tpu.dynamic_rotate %113 by %c1_i32_80 dim 1 : vector<16x128xf32>, i32 -> vector<16x128xf32>
    %127 = vector.broadcast %14 : vector<1x128xf32> to vector<16x128xf32>
    %128 = arith.mulf %126, %127 : vector<16x128xf32>
    %c48_81 = arith.constant 48 : index
    %c0_82 = arith.constant 0 : index
    %129 = vector.load %arg9[%c48_81, %c0_82] : memref<145x128xf32, #tpu.memory_space<vmem>>, vector<16x128xf32>
    tpu.vector_store %arg9[%c48_81, %c0_82], %128 {strides = array<i32>} : memref<145x128xf32, #tpu.memory_space<vmem>>, vector<16x128xf32>,
    %c64_83 = arith.constant 64 : index
    %c0_84 = arith.constant 0 : index
    %130 = vector.load %arg9[%c64_83, %c0_84] : memref<145x128xf32, #tpu.memory_space<vmem>>, vector<16x128xf32>
    tpu.vector_store %arg9[%c64_83, %c0_84], %113 {strides = array<i32>} : memref<145x128xf32, #tpu.memory_space<vmem>>, vector<16x128xf32>,
    %c127_i32_85 = arith.constant 127 : i32
    %131 = tpu.dynamic_rotate %113 by %c127_i32_85 dim 1 : vector<16x128xf32>, i32 -> vector<16x128xf32>
    %132 = vector.broadcast %16 : vector<1x128xf32> to vector<16x128xf32>
    %133 = arith.mulf %131, %132 : vector<16x128xf32>
    %c80_86 = arith.constant 80 : index
    %c0_87 = arith.constant 0 : index
    %134 = vector.load %arg9[%c80_86, %c0_87] : memref<145x128xf32, #tpu.memory_space<vmem>>, vector<16x128xf32>
    tpu.vector_store %arg9[%c80_86, %c0_87], %133 {strides = array<i32>} : memref<145x128xf32, #tpu.memory_space<vmem>>, vector<16x128xf32>,
    %c121_i32_88 = arith.constant 121 : i32
    %135 = tpu.dynamic_rotate %113 by %c121_i32_88 dim 1 : vector<16x128xf32>, i32 -> vector<16x128xf32>
    %136 = vector.broadcast %18 : vector<1x128xf32> to vector<16x128xf32>
    %137 = arith.mulf %135, %136 : vector<16x128xf32>
    %c96_89 = arith.constant 96 : index
    %c0_90 = arith.constant 0 : index
    %138 = vector.load %arg9[%c96_89, %c0_90] : memref<145x128xf32, #tpu.memory_space<vmem>>, vector<16x128xf32>
    tpu.vector_store %arg9[%c96_89, %c0_90], %137 {strides = array<i32>} : memref<145x128xf32, #tpu.memory_space<vmem>>, vector<16x128xf32>,
    %c120_i32_91 = arith.constant 120 : i32
    %139 = tpu.dynamic_rotate %113 by %c120_i32_91 dim 1 : vector<16x128xf32>, i32 -> vector<16x128xf32>
    %140 = vector.broadcast %20 : vector<1x128xf32> to vector<16x128xf32>
    %141 = arith.mulf %139, %140 : vector<16x128xf32>
    %c112_92 = arith.constant 112 : index
    %c0_93 = arith.constant 0 : index
    %142 = vector.load %arg9[%c112_92, %c0_93] : memref<145x128xf32, #tpu.memory_space<vmem>>, vector<16x128xf32>
    tpu.vector_store %arg9[%c112_92, %c0_93], %141 {strides = array<i32>} : memref<145x128xf32, #tpu.memory_space<vmem>>, vector<16x128xf32>,
    %c119_i32_94 = arith.constant 119 : i32
    %143 = tpu.dynamic_rotate %113 by %c119_i32_94 dim 1 : vector<16x128xf32>, i32 -> vector<16x128xf32>
    %144 = vector.broadcast %22 : vector<1x128xf32> to vector<16x128xf32>
    %145 = arith.mulf %143, %144 : vector<16x128xf32>
    %c128_95 = arith.constant 128 : index
    %c0_96 = arith.constant 0 : index
    %146 = vector.load %arg9[%c128_95, %c0_96] : memref<145x128xf32, #tpu.memory_space<vmem>>, vector<16x128xf32>
    tpu.vector_store %arg9[%c128_95, %c0_96], %145 {strides = array<i32>} : memref<145x128xf32, #tpu.memory_space<vmem>>, vector<16x128xf32>,
    %c0_97 = arith.constant 0 : index
    %c0_98 = arith.constant 0 : index
    %147 = vector.load %arg6[%c0_97, %c0_98] : memref<4x145xf32, #tpu.memory_space<vmem>>, vector<4x145xf32>
    %c0_99 = arith.constant 0 : index
    %c0_100 = arith.constant 0 : index
    %148 = vector.load %arg9[%c0_99, %c0_100] : memref<145x128xf32, #tpu.memory_space<vmem>>, vector<145x128xf32>
    %cst_101 = arith.constant dense<0.000000e+00> : vector<4x128xf32>
    %149 = tpu.matmul %147, %148, %cst_101 {dimension_numbers = #tpu.dot_dimension_numbers<[1], [0], [0], [1], [0, 0, 1, 1], [], []>} : vector<4x145xf32>, vector<145x128xf32>, vector<4x128xf32> -> vector<4x128xf32>
    %cst_102 = arith.constant 0.000000e+00 : f32
    %150 = vector.broadcast %cst_102 : f32 to vector<4x128xf32>
    %151 = arith.cmpf oge, %149, %150 : vector<4x128xf32>
    %152 = vector.broadcast %3 : f32 to vector<4x128xf32>
    %153 = arith.mulf %152, %149 : vector<4x128xf32>
    %154 = arith.select %151, %149, %153 : vector<4x128xi1>, vector<4x128xf32>
    %155 = arith.addf %154, %71 : vector<4x128xf32>
    %c0_103 = arith.constant 0 : index
    %c0_104 = arith.constant 0 : index
    %156 = vector.load %arg8[%c0_103, %c0_104] : memref<4x128xf32, #tpu.memory_space<vmem>>, vector<4x128xf32>
    tpu.vector_store %arg8[%c0_103, %c0_104], %155 {strides = array<i32>} : memref<4x128xf32, #tpu.memory_space<vmem>>, vector<4x128xf32>,
    return
  }
  func.func @transform_0(%arg0: i32) -> i32 {
    %c0_i32 = arith.constant 0 : i32
    %c0_i32_0 = arith.constant 0 : i32
    return %c0_i32 : i32
  }
  func.func @transform_1(%arg0: i32) -> (i32, i32) {
    %c0_i32 = arith.constant 0 : i32
    %c0_i32_0 = arith.constant 0 : i32
    return %c0_i32, %arg0 : i32, i32
  }
  func.func @transform_2(%arg0: i32) -> (i32, i32) {
    %c0_i32 = arith.constant 0 : i32
    %c0_i32_0 = arith.constant 0 : i32
    %c0_i32_1 = arith.constant 0 : i32
    return %c0_i32, %c0_i32_0 : i32, i32
  }
  func.func @transform_3(%arg0: i32) -> (i32, i32) {
    %c0_i32 = arith.constant 0 : i32
    %c0_i32_0 = arith.constant 0 : i32
    %c0_i32_1 = arith.constant 0 : i32
    return %c0_i32, %c0_i32_0 : i32, i32
  }
  func.func @transform_4(%arg0: i32) -> (i32, i32) {
    %c0_i32 = arith.constant 0 : i32
    %c0_i32_0 = arith.constant 0 : i32
    %c0_i32_1 = arith.constant 0 : i32
    return %c0_i32, %c0_i32_0 : i32, i32
  }
  func.func @transform_5(%arg0: i32) -> (i32, i32) {
    %c0_i32 = arith.constant 0 : i32
    %c0_i32_0 = arith.constant 0 : i32
    %c0_i32_1 = arith.constant 0 : i32
    return %c0_i32, %c0_i32_0 : i32, i32
  }
  func.func @transform_6(%arg0: i32) -> (i32, i32, i32) {
    %c0_i32 = arith.constant 0 : i32
    %c0_i32_0 = arith.constant 0 : i32
    %c0_i32_1 = arith.constant 0 : i32
    %c0_i32_2 = arith.constant 0 : i32
    return %c0_i32, %c0_i32_0, %c0_i32_1 : i32, i32, i32
  }
  func.func @transform_7(%arg0: i32) -> (i32, i32) {
    %c0_i32 = arith.constant 0 : i32
    %c0_i32_0 = arith.constant 0 : i32
    return %c0_i32, %arg0 : i32, i32
  }
}

</mosaic_0001>

<llo_original>
// kernel: tpu_custom_call.1
$region0: #{tpu_custom_call.1}
  #allocation0 [shape = 'u32[]', space=smem, size = 0x4, offset = 0x4, fixed_abs, tag = 'smem constant byte address 0x4 - core index']
  #allocation1 [shape = 'u32[72,128]{1,0:T(1,128)}', space=vmem, size = 0x9000, scoped, tag = 'internal scratch']
  #allocation2 [shape = 'f32[145,128]{1,0:T(8,128)}', space=vmem, size = 0x13000, scoped, tag = 'scratch operand']
  #allocation3 [shape = 'f32[37,128]{1,0:T(8,128)}', space=vmem, size = 0x5000, scoped, tag = 'scratch operand']
  %s0 = inlined_call_operand.hbm [shape: f32[4], index: 0, kind: input, shape index: {}]
  %s1 = inlined_call_operand.hbm [shape: f32[33,128], index: 1, kind: input, shape index: {}]
  %s2 = inlined_call_operand.hbm [shape: f32[16,33], index: 2, kind: input, shape index: {}]
  %s3 = inlined_call_operand.hbm [shape: f32[4,145], index: 3, kind: input, shape index: {}]
  %s4 = inlined_call_operand.hbm [shape: f32[16,37], index: 4, kind: input, shape index: {}]
  %s5 = inlined_call_operand.hbm [shape: f32[4,145], index: 5, kind: input, shape index: {}]
  %s6 = inlined_call_operand.hbm [shape: f32[9,1,128], index: 6, kind: input, shape index: {}]
  %s7 = inlined_call_operand.hbm [shape: f32[4,128], index: 7, kind: output, shape index: {}]
  %s8 = sld [smem:[#allocation0]]
  $region66: #{tpu_custom_call.1} parent=0
    _
  %s10 = ssub.s32 1, %s8
  %s11 = scalar_select 0, %s10, %s8
  $region1: #{tpu_custom_call.1} parent=0
    #allocation4 [shape = 'u8[512]{0}', space=smem, size = 0x200, scoped, tag = 'input window, operand 0, single buffered']
    #allocation5 [shape = 's32[1]{0}', space=sflag, size = 0x4, scoped, tag = 'scoped memory for tpu_custom_call.1']
    #allocation6 [shape = 's32[1]{0}', space=sflag, size = 0x4, scoped, tag = 'scoped memory for tpu_custom_call.1']
    #allocation7 [shape = 's32[1]{0}', space=sflag, size = 0x4, scoped, tag = 'scoped memory for tpu_custom_call.1']
    #allocation8 [shape = 'u8[20480]{0}', space=vmem, size = 0x5000, scoped, tag = 'input window, operand 1, single buffered']
    #allocation9 [shape = 'u8[8192]{0}', space=vmem, size = 0x2000, scoped, tag = 'input window, operand 2, single buffered']
    #allocation10 [shape = 's32[1]{0}', space=sflag, size = 0x4, scoped, tag = 'scoped memory for tpu_custom_call.1']
    #allocation11 [shape = 'u8[4096]{0}', space=vmem, size = 0x1000, scoped, tag = 'input window, operand 3, single buffered']
    #allocation12 [shape = 'u8[8192]{0}', space=vmem, size = 0x2000, scoped, tag = 'input window, operand 4, single buffered']
    #allocation13 [shape = 's32[1]{0}', space=sflag, size = 0x4, scoped, tag = 'scoped memory for tpu_custom_call.1']
    #allocation14 [shape = 'u8[4096]{0}', space=vmem, size = 0x1000, scoped, tag = 'input window, operand 5, single buffered']
    #allocation15 [shape = 'u8[4608]{0}', space=vmem, size = 0x1400, scoped, tag = 'input window, operand 6, single buffered']
    #allocation16 [shape = 's32[1]{0}', space=sflag, size = 0x4, scoped, tag = 'scoped memory for tpu_custom_call.1']
    #allocation17 [shape = 'u8[2048]{0}', space=vmem, size = 0x800, scoped, tag = 'output window, operand 0, single buffered']
    %12 = vsyncpa [#allocation7], 0
    %13 = vsyncpa [#allocation5], 0
    %14 = vsyncpa [#allocation10], 0
    %15 = vsyncpa [#allocation13], 0
    %16 = vsyncpa [#allocation16], 0
    %17 = vsyncpa [#allocation6], 0
    // Predicated region
    $region2: #{tpu_custom_call.1} parent=1 // pred_check
      _
    $region3: #{tpu_custom_call.1} parent=1 // pred_check_branch
      %19 = sbr.rel (0) target = $region5
    $region4: #{tpu_custom_call.1} parent=1 // pred_region
      %21 = vsyncadd [#allocation7], 0
      %s23 = sshll.u32 %s0, 4
      %s24 = int_to_ptr.hbm [resolvable:$true] %s23
      %26 = dma.hbm_to_smem %s24, 16, [#allocation4], [#allocation7]
    $region5: #{tpu_custom_call.1} parent=1 // pred_fallthru
      _
    // Predicated region
    $region6: #{tpu_custom_call.1} parent=1 // pred_check
      _
    $region7: #{tpu_custom_call.1} parent=1 // pred_check_branch
      %28 = sbr.rel (0) target = $region9
    $region8: #{tpu_custom_call.1} parent=1 // pred_region
      %30 = vsyncadd [#allocation5], 0
      %s31 = sshll.u32 %s1, 4
      %s32 = int_to_ptr.hbm [resolvable:$true] %s31
      %s33 = sshll.u32 [#allocation8], 4
      %s34 = int_to_ptr.vmem [resolvable:$true] %s33
      %39 = dma.hbm_to_vmem [thread:$0]  %s32, 640, %s34, [#allocation5], 128, 128, 8
    $region9: #{tpu_custom_call.1} parent=1 // pred_fallthru
      _
    // Predicated region
    $region10: #{tpu_custom_call.1} parent=1 // pred_check
      _
    $region11: #{tpu_custom_call.1} parent=1 // pred_check_branch
      %41 = sbr.rel (0) target = $region13
    $region12: #{tpu_custom_call.1} parent=1 // pred_region
      %43 = vsyncadd [#allocation10], 0
      %s44 = sshll.u32 %s2, 4
      %s45 = int_to_ptr.hbm [resolvable:$true] %s44
      %s46 = sshll.u32 [#allocation9], 4
      %s47 = int_to_ptr.vmem [resolvable:$true] %s46
      %52 = dma.hbm_to_vmem [thread:$0]  %s45, 256, %s47, [#allocation10], 128, 128, 8
    $region13: #{tpu_custom_call.1} parent=1 // pred_fallthru
      _
    // Predicated region
    $region14: #{tpu_custom_call.1} parent=1 // pred_check
      _
    $region15: #{tpu_custom_call.1} parent=1 // pred_check_branch
      %54 = sbr.rel (0) target = $region17
    $region16: #{tpu_custom_call.1} parent=1 // pred_region
      %56 = vsyncadd [#allocation10], 0
      %s58 = sshll.u32 %s3, 4
      %s59 = int_to_ptr.hbm [resolvable:$true] %s58
      %s60 = sshll.u32 [#allocation11], 4
      %s61 = int_to_ptr.vmem [resolvable:$true] %s60
      %63 = dma.hbm_to_vmem [thread:$0]  %s59, 128, %s61, [#allocation10]
    $region17: #{tpu_custom_call.1} parent=1 // pred_fallthru
      _
    // Predicated region
    $region18: #{tpu_custom_call.1} parent=1 // pred_check
      _
    $region19: #{tpu_custom_call.1} parent=1 // pred_check_branch
      %65 = sbr.rel (0) target = $region21
    $region20: #{tpu_custom_call.1} parent=1 // pred_region
      %67 = vsyncadd [#allocation13], 0
      %s68 = sshll.u32 %s4, 4
      %s69 = int_to_ptr.hbm [resolvable:$true] %s68
      %s70 = sshll.u32 [#allocation12], 4
      %s71 = int_to_ptr.vmem [resolvable:$true] %s70
      %76 = dma.hbm_to_vmem [thread:$0]  %s69, 256, %s71, [#allocation13], 128, 128, 8
    $region21: #{tpu_custom_call.1} parent=1 // pred_fallthru
      _
    // Predicated region
    $region22: #{tpu_custom_call.1} parent=1 // pred_check
      _
    $region23: #{tpu_custom_call.1} parent=1 // pred_check_branch
      %78 = sbr.rel (0) target = $region25
    $region24: #{tpu_custom_call.1} parent=1 // pred_region
      %80 = vsyncadd [#allocation13], 0
      %s82 = sshll.u32 %s5, 4
      %s83 = int_to_ptr.hbm [resolvable:$true] %s82
      %s84 = sshll.u32 [#allocation14], 4
      %s85 = int_to_ptr.vmem [resolvable:$true] %s84
      %87 = dma.hbm_to_vmem [thread:$0]  %s83, 128, %s85, [#allocation13]
    $region25: #{tpu_custom_call.1} parent=1 // pred_fallthru
      _
    // Predicated region
    $region26: #{tpu_custom_call.1} parent=1 // pred_check
      _
    $region27: #{tpu_custom_call.1} parent=1 // pred_check_branch
      %89 = sbr.rel (0) target = $region29
    $region28: #{tpu_custom_call.1} parent=1 // pred_region
      %91 = vsyncadd [#allocation16], 0
      %s92 = sshll.u32 %s6, 4
      %s93 = int_to_ptr.hbm [resolvable:$true] %s92
      %s94 = sshll.u32 [#allocation15], 4
      %s95 = int_to_ptr.vmem [resolvable:$true] %s94
      %100 = dma.hbm_to_vmem [thread:$0]  %s93, 144, %s95, [#allocation16], 16, 16, 1
    $region29: #{tpu_custom_call.1} parent=1 // pred_fallthru
      _
    // Predicated region
    $region30: #{tpu_custom_call.1} parent=1 // pred_check
      _
    $region31: #{tpu_custom_call.1} parent=1 // pred_check_branch
      %102 = sbr.rel (0) target = $region33
    $region32: #{tpu_custom_call.1} parent=1 // pred_region
      %104 = dma.done [#allocation7], 16
    $region33: #{tpu_custom_call.1} parent=1 // pred_fallthru
      _
    // Predicated region
    $region34: #{tpu_custom_call.1} parent=1 // pred_check
      _
    $region35: #{tpu_custom_call.1} parent=1 // pred_check_branch
      %106 = sbr.rel (0) target = $region37
    $region36: #{tpu_custom_call.1} parent=1 // pred_region
      %108 = dma.done [#allocation5], 640
    $region37: #{tpu_custom_call.1} parent=1 // pred_fallthru
      _
    // Predicated region
    $region38: #{tpu_custom_call.1} parent=1 // pred_check
      _
    $region39: #{tpu_custom_call.1} parent=1 // pred_check_branch
      %110 = sbr.rel (0) target = $region41
    $region40: #{tpu_custom_call.1} parent=1 // pred_region
      %112 = dma.done [#allocation10], 256
    $region41: #{tpu_custom_call.1} parent=1 // pred_fallthru
      _
    // Predicated region
    $region42: #{tpu_custom_call.1} parent=1 // pred_check
      _
    $region43: #{tpu_custom_call.1} parent=1 // pred_check_branch
      %114 = sbr.rel (0) target = $region45
    $region44: #{tpu_custom_call.1} parent=1 // pred_region
      %116 = dma.done [#allocation10], 128
    $region45: #{tpu_custom_call.1} parent=1 // pred_fallthru
      _
    // Predicated region
    $region46: #{tpu_custom_call.1} parent=1 // pred_check
      _
    $region47: #{tpu_custom_call.1} parent=1 // pred_check_branch
      %118 = sbr.rel (0) target = $region49
    $region48: #{tpu_custom_call.1} parent=1 // pred_region
      %120 = dma.done [#allocation13], 256
    $region49: #{tpu_custom_call.1} parent=1 // pred_fallthru
      _
    // Predicated region
    $region50: #{tpu_custom_call.1} parent=1 // pred_check
      _
    $region51: #{tpu_custom_call.1} parent=1 // pred_check_branch
      %122 = sbr.rel (0) target = $region53
    $region52: #{tpu_custom_call.1} parent=1 // pred_region
      %124 = dma.done [#allocation13], 128
    $region53: #{tpu_custom_call.1} parent=1 // pred_fallthru
      _
    // Predicated region
    $region54: #{tpu_custom_call.1} parent=1 // pred_check
      _
    $region55: #{tpu_custom_call.1} parent=1 // pred_check_branch
      %126 = sbr.rel (0) target = $region57
    $region56: #{tpu_custom_call.1} parent=1 // pred_region
      %128 = dma.done [#allocation16], 144
    $region57: #{tpu_custom_call.1} parent=1 // pred_fallthru
      _
    %129 = sfence
    %s130 = sld [smem:[#allocation4]]
    %s131 = sld [smem:[#allocation4 + $0x1]]
    %s132 = sld [smem:[#allocation4 + $0x2]]
    %s133 = sld [smem:[#allocation4 + $0x3]]
    %134 = vst [vmem:[#allocation2 + $0x90] sm:$0x1] 1.0
    %135 = vst [vmem:[#allocation3 + $0x24] sm:$0x1] 1.0
    %v136 = vld [vmem:[#allocation15] sm:$0x1]
    %s137 = scalar_lea.vmem [#allocation15], 1
    %v138 = vld [vmem:[%s137] sm:$0x1]
    %s139 = scalar_lea.vmem [#allocation15], 2
    %v140 = vld [vmem:[%s139] sm:$0x1]
    %s141 = scalar_lea.vmem [#allocation15], 3
    %v142 = vld [vmem:[%s141] sm:$0x1]
    %s143 = scalar_lea.vmem [#allocation15], 5
    %v144 = vld [vmem:[%s143] sm:$0x1]
    %s145 = scalar_lea.vmem [#allocation15], 6
    %v146 = vld [vmem:[%s145] sm:$0x1]
    %s147 = scalar_lea.vmem [#allocation15], 7
    %v148 = vld [vmem:[%s147] sm:$0x1]
    %s149 = scalar_lea.vmem [#allocation15], 8
    %v150 = vld [vmem:[%s149] sm:$0x1]
    %v151 = vld [vmem:[#allocation8] sm:$0xff]
    %v152 = vld [vmem:[#allocation8 + $0x8] sm:$0xff]
    %v153 = vld [vmem:[#allocation8 + $0x10] sm:$0xff]
    %v154 = vld [vmem:[#allocation8 + $0x18] sm:$0xff]
    %v155 = vld [vmem:[#allocation8 + $0x20] sm:$0x1]
    %v156 = vld [vmem:[#allocation9] sm:$0xff]
    %v157 = vld [vmem:[#allocation9 + $0x8] sm:$0xff]
    %vm158 = vcmask 269312
    %v160 = vsel %vm158, %v156, 0
    %v163 = vsel %vm158, %v157, 0
    %vm165 = vcmask 1040384
    %v167 = vsel %vm165, %v155, 0
    %169 = vmatpush.msra.mxu0 0.0
    %170 = vmatpush.msra.mxu0 0.0
    %171 = vmatpush.msra.mxu0 0.0
    %172 = vmatpush.msra.mxu0 0.0
    %173 = vmatpush.msra.mxu0 0.0
    %174 = vmatpush.msra.mxu0 0.0
    %175 = vmatpush.msra.mxu0 0.0
    %176 = vmatpush.msra.mxu0 0.0
    %177 = vmatpush.msra.mxu0 0.0
    %178 = vmatpush.msra.mxu0 0.0
    %179 = vmatpush.msra.mxu0 0.0
    %180 = vmatpush.msra.mxu0 %v167
    %181 = vmatpush.msra.mxu0 %v154
    %182 = vmatpush.msra.mxu0 %v153
    %183 = vmatpush.msra.mxu0 %v152
    %184 = vmatpush.msra.mxu0 %v151
    %185 = vmatmul.f32.gmra.mxu0 %v160
    %v186 = vpop.f32.mrf.mxu0
    %v187 = vadd.f32 0.0, %v186
    %188 = vmatmul.f32.gmra.mxu0 %v163
    %v189 = vpop.f32.mrf.mxu0
    %v190 = vadd.f32 0.0, %v189
    %191 = vdwg.mxu0
    %vm192 = vcmp.ge.f32.partialorder %v187, 0.0
    %vm193 = vcmp.ge.f32.partialorder %v190, 0.0
    %v194 = vstv %s130
    %v195 = vmul.f32 %v194, %v187
    %v196 = vmul.f32 %v194, %v190
    %v197 = vsel %vm192, %v187, %v195
    %v198 = vsel %vm193, %v190, %v196
    %199 = vrot.lane.b32.xlu0 %v197, 9
    %v200 = vpop.permute.xlu0 %199
    %201 = vrot.lane.b32.xlu0 %v198, 9
    %v202 = vpop.permute.xlu0 %201
    %v204 = vperm.slane %v136, 0
    %v206 = vmul.f32 %v200, %v204
    %v207 = vmul.f32 %v202, %v204
    %208 = vst [vmem:[#allocation2] sm:$0xff] %v206
    %209 = vst [vmem:[#allocation2 + $0x8] sm:$0xff] %v207
    %210 = vrot.lane.b32.xlu0 %v197, 8
    %v211 = vpop.permute.xlu0 %210
    %212 = vrot.lane.b32.xlu0 %v198, 8
    %v213 = vpop.permute.xlu0 %212
    %v215 = vperm.slane %v138, 0
    %v217 = vmul.f32 %v211, %v215
    %v218 = vmul.f32 %v213, %v215
    %219 = vst [vmem:[#allocation2 + $0x10] sm:$0xff] %v217
    %220 = vst [vmem:[#allocation2 + $0x18] sm:$0xff] %v218
    %221 = vrot.lane.b32.xlu0 %v197, 7
    %v222 = vpop.permute.xlu0 %221
    %223 = vrot.lane.b32.xlu0 %v198, 7
    %v224 = vpop.permute.xlu0 %223
    %v226 = vperm.slane %v140, 0
    %v228 = vmul.f32 %v222, %v226
    %v229 = vmul.f32 %v224, %v226
    %230 = vst [vmem:[#allocation2 + $0x20] sm:$0xff] %v228
    %231 = vst [vmem:[#allocation2 + $0x28] sm:$0xff] %v229
    %232 = vrot.lane.b32.xlu0 %v197, 1
    %v233 = vpop.permute.xlu0 %232
    %234 = vrot.lane.b32.xlu0 %v198, 1
    %v235 = vpop.permute.xlu0 %234
    %v237 = vperm.slane %v142, 0
    %v239 = vmul.f32 %v233, %v237
    %v240 = vmul.f32 %v235, %v237
    %241 = vst [vmem:[#allocation2 + $0x30] sm:$0xff] %v239
    %242 = vst [vmem:[#allocation2 + $0x38] sm:$0xff] %v240
    %243 = vst [vmem:[#allocation2 + $0x40] sm:$0xff] %v197
    %244 = vst [vmem:[#allocation2 + $0x48] sm:$0xff] %v198
    %245 = vrot.lane.b32.xlu0 %v197, 127
    %v246 = vpop.permute.xlu0 %245
    %247 = vrot.lane.b32.xlu0 %v198, 127
    %v248 = vpop.permute.xlu0 %247
    %v250 = vperm.slane %v144, 0
    %v252 = vmul.f32 %v246, %v250
    %v253 = vmul.f32 %v248, %v250
    %254 = vst [vmem:[#allocation2 + $0x50] sm:$0xff] %v252
    %255 = vst [vmem:[#allocation2 + $0x58] sm:$0xff] %v253
    %256 = vrot.lane.b32.xlu0 %v197, 121
    %v257 = vpop.permute.xlu0 %256
    %258 = vrot.lane.b32.xlu0 %v198, 121
    %v259 = vpop.permute.xlu0 %258
    %v261 = vperm.slane %v146, 0
    %v263 = vmul.f32 %v257, %v261
    %v264 = vmul.f32 %v259, %v261
    %265 = vst [vmem:[#allocation2 + $0x60] sm:$0xff] %v263
    %266 = vst [vmem:[#allocation2 + $0x68] sm:$0xff] %v264
    %267 = vrot.lane.b32.xlu0 %v197, 120
    %v268 = vpop.permute.xlu0 %267
    %269 = vrot.lane.b32.xlu0 %v198, 120
    %v270 = vpop.permute.xlu0 %269
    %v272 = vperm.slane %v148, 0
    %v274 = vmul.f32 %v268, %v272
    %v275 = vmul.f32 %v270, %v272
    %276 = vst [vmem:[#allocation2 + $0x70] sm:$0xff] %v274
    %277 = vst [vmem:[#allocation2 + $0x78] sm:$0xff] %v275
    %278 = vrot.lane.b32.xlu0 %v197, 119
    %v279 = vpop.permute.xlu0 %278
    %280 = vrot.lane.b32.xlu0 %v198, 119
    %v281 = vpop.permute.xlu0 %280
    %v283 = vperm.slane %v150, 0
    %v285 = vmul.f32 %v279, %v283
    %v286 = vmul.f32 %v281, %v283
    %287 = vst [vmem:[#allocation2 + $0x80] sm:$0xff] %v285
    %288 = vst [vmem:[#allocation2 + $0x88] sm:$0xff] %v286
    %v289 = vld [vmem:[#allocation11] sm:$0xff]
    %v290 = vld [vmem:[#allocation2] sm:$0xff]
    %v291 = vld [vmem:[#allocation2 + $0x8] sm:$0xff]
    %v292 = vld [vmem:[#allocation2 + $0x10] sm:$0xff]
    %v293 = vld [vmem:[#allocation2 + $0x18] sm:$0xff]
    %v294 = vld [vmem:[#allocation2 + $0x20] sm:$0xff]
    %v295 = vld [vmem:[#allocation2 + $0x28] sm:$0xff]
    %v296 = vld [vmem:[#allocation2 + $0x30] sm:$0xff]
    %v297 = vld [vmem:[#allocation2 + $0x38] sm:$0xff]
    %v298 = vld [vmem:[#allocation2 + $0x40] sm:$0xff]
    %v299 = vld [vmem:[#allocation2 + $0x48] sm:$0xff]
    %v300 = vld [vmem:[#allocation2 + $0x50] sm:$0xff]
    %v301 = vld [vmem:[#allocation2 + $0x58] sm:$0xff]
    %v302 = vld [vmem:[#allocation2 + $0x60] sm:$0xff]
    %v303 = vld [vmem:[#allocation2 + $0x68] sm:$0xff]
    %v304 = vld [vmem:[#allocation2 + $0x70] sm:$0xff]
    %v305 = vld [vmem:[#allocation2 + $0x78] sm:$0xff]
    %v306 = vld [vmem:[#allocation2 + $0x80] sm:$0xff]
    %v307 = vld [vmem:[#allocation2 + $0x88] sm:$0xff]
    %v308 = vld [vmem:[#allocation2 + $0x90] sm:$0x1]
    %310 = vst [vmem:[#allocation1] ss:$2 sm:$0xff] %v289
    %v311 = vld.sshfl [vmem:[#allocation1] sm:$0xff pattern:$0x75316420]
    %v312 = vld.sshfl [vmem:[#allocation1 + $0x8] sm:$0xff pattern:$0x75316420]
    %vm314 = vcmask 138240
    %v315 = vsel %vm314, %v312, 0
    %v318 = vsel %vm165, %v308, 0
    %320 = vmatpush.msra.mxu0 %v305
    %321 = vmatpush.msra.mxu0 %v304
    %322 = vmatpush.msra.mxu0 %v303
    %323 = vmatpush.msra.mxu0 %v302
    %324 = vmatpush.msra.mxu0 %v301
    %325 = vmatpush.msra.mxu0 %v300
    %326 = vmatpush.msra.mxu0 %v299
    %327 = vmatpush.msra.mxu0 %v298
    %328 = vmatpush.msra.mxu0 %v297
    %329 = vmatpush.msra.mxu0 %v296
    %330 = vmatpush.msra.mxu0 %v295
    %331 = vmatpush.msra.mxu0 %v294
    %332 = vmatpush.msra.mxu0 %v293
    %333 = vmatpush.msra.mxu0 %v292
    %334 = vmatpush.msra.mxu0 %v291
    %335 = vmatpush.msra.mxu0 %v290
    %336 = vmatmul.f32.gmra.mxu0 %v311
    %v337 = vpop.f32.mrf.mxu0
    %v338 = vadd.f32 0.0, %v337
    %339 = vdwg.mxu0
    %340 = vmatpush.msra.mxu0 0.0
    %341 = vmatpush.msra.mxu0 0.0
    %342 = vmatpush.msra.mxu0 0.0
    %343 = vmatpush.msra.mxu0 0.0
    %344 = vmatpush.msra.mxu0 0.0
    %345 = vmatpush.msra.mxu0 0.0
    %346 = vmatpush.msra.mxu0 0.0
    %347 = vmatpush.msra.mxu0 0.0
    %348 = vmatpush.msra.mxu0 0.0
    %349 = vmatpush.msra.mxu0 0.0
    %350 = vmatpush.msra.mxu0 0.0
    %351 = vmatpush.msra.mxu0 0.0
    %352 = vmatpush.msra.mxu0 0.0
    %353 = vmatpush.msra.mxu0 %v318
    %354 = vmatpush.msra.mxu0 %v307
    %355 = vmatpush.msra.mxu0 %v306
    %356 = vmatmul.f32.gmra.mxu0 %v315
    %v357 = vpop.f32.mrf.mxu0
    %v358 = vadd.f32 %v338, %v357
    %359 = vdwg.mxu0
    %vm360 = vcmp.ge.f32.partialorder %v358, 0.0
    %v361 = vstv %s131
    %v362 = vmul.f32 %v361, %v358
    %v363 = vsel %vm360, %v358, %v362
    %364 = vrot.lane.b32.xlu0 %v363, 9
    %v365 = vpop.permute.xlu0 %364
    %v366 = vmul.f32 %v365, %v204
    %367 = vst [vmem:[#allocation3] sm:$0xf] %v366
    %368 = vrot.lane.b32.xlu0 %v363, 8
    %v369 = vpop.permute.xlu0 %368
    %v370 = vmul.f32 %v369, %v215
    %371 = vst [vmem:[#allocation3 + $0x4] sm:$0xf] %v370
    %372 = vrot.lane.b32.xlu0 %v363, 7
    %v373 = vpop.permute.xlu0 %372
    %v374 = vmul.f32 %v373, %v226
    %375 = vst [vmem:[#allocation3 + $0x8] sm:$0xf] %v374
    %376 = vrot.lane.b32.xlu0 %v363, 1
    %v377 = vpop.permute.xlu0 %376
    %v378 = vmul.f32 %v377, %v237
    %379 = vst [vmem:[#allocation3 + $0xc] sm:$0xf] %v378
    %380 = vst [vmem:[#allocation3 + $0x10] sm:$0xf] %v363
    %381 = vrot.lane.b32.xlu0 %v363, 127
    %v382 = vpop.permute.xlu0 %381
    %v383 = vmul.f32 %v382, %v250
    %384 = vst [vmem:[#allocation3 + $0x14] sm:$0xf] %v383
    %385 = vrot.lane.b32.xlu0 %v363, 121
    %v386 = vpop.permute.xlu0 %385
    %v387 = vmul.f32 %v386, %v261
    %388 = vst [vmem:[#allocation3 + $0x18] sm:$0xf] %v387
    %389 = vrot.lane.b32.xlu0 %v363, 120
    %v390 = vpop.permute.xlu0 %389
    %v391 = vmul.f32 %v390, %v272
    %392 = vst [vmem:[#allocation3 + $0x1c] sm:$0xf] %v391
    %393 = vrot.lane.b32.xlu0 %v363, 119
    %v394 = vpop.permute.xlu0 %393
    %v395 = vmul.f32 %v394, %v283
    %396 = vst [vmem:[#allocation3 + $0x20] sm:$0xf] %v395
    %v397 = vld [vmem:[#allocation12] sm:$0xff]
    %v398 = vld [vmem:[#allocation12 + $0x8] sm:$0xff]
    %v399 = vld [vmem:[#allocation3] sm:$0xff]
    %v400 = vld [vmem:[#allocation3 + $0x8] sm:$0xff]
    %v401 = vld [vmem:[#allocation3 + $0x10] sm:$0xff]
    %v402 = vld [vmem:[#allocation3 + $0x18] sm:$0xff]
    %v403 = vld [vmem:[#allocation3 + $0x20] sm:$0x1f]
    %vm404 = vcmask 302080
    %v406 = vsel %vm404, %v397, 0
    %v409 = vsel %vm404, %v398, 0
    %vm411 = vcmask 1044480
    %v413 = vsel %vm411, %v403, 0
    %415 = vmatpush.msra.mxu0 0.0
    %416 = vmatpush.msra.mxu0 0.0
    %417 = vmatpush.msra.mxu0 0.0
    %418 = vmatpush.msra.mxu0 0.0
    %419 = vmatpush.msra.mxu0 0.0
    %420 = vmatpush.msra.mxu0 0.0
    %421 = vmatpush.msra.mxu0 0.0
    %422 = vmatpush.msra.mxu0 0.0
    %423 = vmatpush.msra.mxu0 0.0
    %424 = vmatpush.msra.mxu0 0.0
    %425 = vmatpush.msra.mxu0 0.0
    %426 = vmatpush.msra.mxu0 %v413
    %427 = vmatpush.msra.mxu0 %v402
    %428 = vmatpush.msra.mxu0 %v401
    %429 = vmatpush.msra.mxu0 %v400
    %430 = vmatpush.msra.mxu0 %v399
    %431 = vmatmul.f32.gmra.mxu0 %v406
    %v432 = vpop.f32.mrf.mxu0
    %v433 = vadd.f32 0.0, %v432
    %434 = vmatmul.f32.gmra.mxu0 %v409
    %v435 = vpop.f32.mrf.mxu0
    %v436 = vadd.f32 0.0, %v435
    %437 = vdwg.mxu0
    %vm438 = vcmp.ge.f32.partialorder %v433, 0.0
    %vm439 = vcmp.ge.f32.partialorder %v436, 0.0
    %v440 = vstv %s132
    %v441 = vmul.f32 %v440, %v433
    %v442 = vmul.f32 %v440, %v436
    %v443 = vsel %vm438, %v433, %v441
    %v444 = vsel %vm439, %v436, %v442
    %v445 = vsub.f32 %v443, %v197
    %v446 = vsub.f32 %v444, %v198
    %447 = vrot.lane.b32.xlu0 %v445, 9
    %v448 = vpop.permute.xlu0 %447
    %449 = vrot.lane.b32.xlu0 %v446, 9
    %v450 = vpop.permute.xlu0 %449
    %v451 = vmul.f32 %v448, %v204
    %v452 = vmul.f32 %v450, %v204
    %453 = vst [vmem:[#allocation2] sm:$0xff] %v451
    %454 = vst [vmem:[#allocation2 + $0x8] sm:$0xff] %v452
    %455 = vrot.lane.b32.xlu0 %v445, 8
    %v456 = vpop.permute.xlu0 %455
    %457 = vrot.lane.b32.xlu0 %v446, 8
    %v458 = vpop.permute.xlu0 %457
    %v459 = vmul.f32 %v456, %v215
    %v460 = vmul.f32 %v458, %v215
    %461 = vst [vmem:[#allocation2 + $0x10] sm:$0xff] %v459
    %462 = vst [vmem:[#allocation2 + $0x18] sm:$0xff] %v460
    %463 = vrot.lane.b32.xlu0 %v445, 7
    %v464 = vpop.permute.xlu0 %463
    %465 = vrot.lane.b32.xlu0 %v446, 7
    %v466 = vpop.permute.xlu0 %465
    %v467 = vmul.f32 %v464, %v226
    %v468 = vmul.f32 %v466, %v226
    %469 = vst [vmem:[#allocation2 + $0x20] sm:$0xff] %v467
    %470 = vst [vmem:[#allocation2 + $0x28] sm:$0xff] %v468
    %471 = vrot.lane.b32.xlu0 %v445, 1
    %v472 = vpop.permute.xlu0 %471
    %473 = vrot.lane.b32.xlu0 %v446, 1
    %v474 = vpop.permute.xlu0 %473
    %v475 = vmul.f32 %v472, %v237
    %v476 = vmul.f32 %v474, %v237
    %477 = vst [vmem:[#allocation2 + $0x30] sm:$0xff] %v475
    %478 = vst [vmem:[#allocation2 + $0x38] sm:$0xff] %v476
    %479 = vst [vmem:[#allocation2 + $0x40] sm:$0xff] %v445
    %480 = vst [vmem:[#allocation2 + $0x48] sm:$0xff] %v446
    %481 = vrot.lane.b32.xlu0 %v445, 127
    %v482 = vpop.permute.xlu0 %481
    %483 = vrot.lane.b32.xlu0 %v446, 127
    %v484 = vpop.permute.xlu0 %483
    %v485 = vmul.f32 %v482, %v250
    %v486 = vmul.f32 %v484, %v250
    %487 = vst [vmem:[#allocation2 + $0x50] sm:$0xff] %v485
    %488 = vst [vmem:[#allocation2 + $0x58] sm:$0xff] %v486
    %489 = vrot.lane.b32.xlu0 %v445, 121
    %v490 = vpop.permute.xlu0 %489
    %491 = vrot.lane.b32.xlu0 %v446, 121
    %v492 = vpop.permute.xlu0 %491
    %v493 = vmul.f32 %v490, %v261
    %v494 = vmul.f32 %v492, %v261
    %495 = vst [vmem:[#allocation2 + $0x60] sm:$0xff] %v493
    %496 = vst [vmem:[#allocation2 + $0x68] sm:$0xff] %v494
    %497 = vrot.lane.b32.xlu0 %v445, 120
    %v498 = vpop.permute.xlu0 %497
    %499 = vrot.lane.b32.xlu0 %v446, 120
    %v500 = vpop.permute.xlu0 %499
    %v501 = vmul.f32 %v498, %v272
    %v502 = vmul.f32 %v500, %v272
    %503 = vst [vmem:[#allocation2 + $0x70] sm:$0xff] %v501
    %504 = vst [vmem:[#allocation2 + $0x78] sm:$0xff] %v502
    %505 = vrot.lane.b32.xlu0 %v445, 119
    %v506 = vpop.permute.xlu0 %505
    %507 = vrot.lane.b32.xlu0 %v446, 119
    %v508 = vpop.permute.xlu0 %507
    %v509 = vmul.f32 %v506, %v283
    %v510 = vmul.f32 %v508, %v283
    %511 = vst [vmem:[#allocation2 + $0x80] sm:$0xff] %v509
    %512 = vst [vmem:[#allocation2 + $0x88] sm:$0xff] %v510
    %v513 = vld [vmem:[#allocation14] sm:$0xff]
    %v514 = vld [vmem:[#allocation2] sm:$0xff]
    %v515 = vld [vmem:[#allocation2 + $0x8] sm:$0xff]
    %v516 = vld [vmem:[#allocation2 + $0x10] sm:$0xff]
    %v517 = vld [vmem:[#allocation2 + $0x18] sm:$0xff]
    %v518 = vld [vmem:[#allocation2 + $0x20] sm:$0xff]
    %v519 = vld [vmem:[#allocation2 + $0x28] sm:$0xff]
    %v520 = vld [vmem:[#allocation2 + $0x30] sm:$0xff]
    %v521 = vld [vmem:[#allocation2 + $0x38] sm:$0xff]
    %v522 = vld [vmem:[#allocation2 + $0x40] sm:$0xff]
    %v523 = vld [vmem:[#allocation2 + $0x48] sm:$0xff]
    %v524 = vld [vmem:[#allocation2 + $0x50] sm:$0xff]
    %v525 = vld [vmem:[#allocation2 + $0x58] sm:$0xff]
    %v526 = vld [vmem:[#allocation2 + $0x60] sm:$0xff]
    %v527 = vld [vmem:[#allocation2 + $0x68] sm:$0xff]
    %v528 = vld [vmem:[#allocation2 + $0x70] sm:$0xff]
    %v529 = vld [vmem:[#allocation2 + $0x78] sm:$0xff]
    %v530 = vld [vmem:[#allocation2 + $0x80] sm:$0xff]
    %v531 = vld [vmem:[#allocation2 + $0x88] sm:$0xff]
    %v532 = vld [vmem:[#allocation2 + $0x90] sm:$0x1]
    %534 = vst [vmem:[#allocation1] ss:$2 sm:$0xff] %v513
    %v535 = vld.sshfl [vmem:[#allocation1] sm:$0xff pattern:$0x75316420]
    %v536 = vld.sshfl [vmem:[#allocation1 + $0x8] sm:$0xff pattern:$0x75316420]
    %v538 = vsel %vm314, %v536, 0
    %v541 = vsel %vm165, %v532, 0
    %543 = vmatpush.msra.mxu0 %v529
    %544 = vmatpush.msra.mxu0 %v528
    %545 = vmatpush.msra.mxu0 %v527
    %546 = vmatpush.msra.mxu0 %v526
    %547 = vmatpush.msra.mxu0 %v525
    %548 = vmatpush.msra.mxu0 %v524
    %549 = vmatpush.msra.mxu0 %v523
    %550 = vmatpush.msra.mxu0 %v522
    %551 = vmatpush.msra.mxu0 %v521
    %552 = vmatpush.msra.mxu0 %v520
    %553 = vmatpush.msra.mxu0 %v519
    %554 = vmatpush.msra.mxu0 %v518
    %555 = vmatpush.msra.mxu0 %v517
    %556 = vmatpush.msra.mxu0 %v516
    %557 = vmatpush.msra.mxu0 %v515
    %558 = vmatpush.msra.mxu0 %v514
    %559 = vmatmul.f32.gmra.mxu0 %v535
    %v560 = vpop.f32.mrf.mxu0
    %v561 = vadd.f32 0.0, %v560
    %562 = vdwg.mxu0
    %563 = vmatpush.msra.mxu0 0.0
    %564 = vmatpush.msra.mxu0 0.0
    %565 = vmatpush.msra.mxu0 0.0
    %566 = vmatpush.msra.mxu0 0.0
    %567 = vmatpush.msra.mxu0 0.0
    %568 = vmatpush.msra.mxu0 0.0
    %569 = vmatpush.msra.mxu0 0.0
    %570 = vmatpush.msra.mxu0 0.0
    %571 = vmatpush.msra.mxu0 0.0
    %572 = vmatpush.msra.mxu0 0.0
    %573 = vmatpush.msra.mxu0 0.0
    %574 = vmatpush.msra.mxu0 0.0
    %575 = vmatpush.msra.mxu0 0.0
    %576 = vmatpush.msra.mxu0 %v541
    %577 = vmatpush.msra.mxu0 %v531
    %578 = vmatpush.msra.mxu0 %v530
    %579 = vmatmul.f32.gmra.mxu0 %v538
    %v580 = vpop.f32.mrf.mxu0
    %v581 = vadd.f32 %v561, %v580
    %582 = vdwg.mxu0
    %vm583 = vcmp.ge.f32.partialorder %v581, 0.0
    %v584 = vstv %s133
    %v585 = vmul.f32 %v584, %v581
    %v586 = vsel %vm583, %v581, %v585
    %v587 = vadd.f32 %v586, %v363
    %588 = vst [vmem:[#allocation17] sm:$0xf] %v587
    // Predicated region
    $region58: #{tpu_custom_call.1} parent=1 // pred_check
      _
    $region59: #{tpu_custom_call.1} parent=1 // pred_check_branch
      %590 = sbr.rel (0) target = $region61
    $region60: #{tpu_custom_call.1} parent=1 // pred_region
      %592 = vsyncadd [#allocation6], 0
      %s594 = sshll.u32 [#allocation17], 4
      %s595 = int_to_ptr.vmem [resolvable:$true] %s594
      %s596 = sshll.u32 %s7, 4
      %s597 = int_to_ptr.hbm [resolvable:$true] %s596
      %599 = dma.vmem_to_hbm [thread:$0]  %s595, 64, %s597, [#allocation6]
    $region61: #{tpu_custom_call.1} parent=1 // pred_fallthru
      _
    // Predicated region
    $region62: #{tpu_custom_call.1} parent=1 // pred_check
      _
    $region63: #{tpu_custom_call.1} parent=1 // pred_check_branch
      %601 = sbr.rel (0) target = $region65
    $region64: #{tpu_custom_call.1} parent=1 // pred_region
      %603 = dma.done [#allocation6], 64
    $region65: #{tpu_custom_call.1} parent=1 // pred_fallthru
      _
    %604 = vsyncpa [#allocation5], 1
    %605 = vsyncpa [#allocation10], 1
    %606 = vsyncpa [#allocation13], 1
    %607 = vsyncpa [#allocation16], 1
    %608 = vsyncpa [#allocation6], 1
    %609 = vsyncpa [#allocation7], 1

</llo_original>
